<compile_context>
chip_gen: v7x
topology: tpu7x:2x2x1
jax: 0.10.0
libtpu: 0.0.40
codegen_flags: <defaults>
</compile_context>

<pallas_src>
import jax
import jax.numpy as jnp
from jax.experimental import pallas as pl
from jax.experimental.pallas import tpu as pltpu

# Offsets into the packed parameter vector (all f32 scalars, SMEM-resident).
_W1_OFF = 0        # 49 values, row-major (out_feature, in_feature)
_B1_OFF = 49       # 7 values
_W2_OFF = 56       # 7 values
_B2_OFF = 63       # 1 value
_W3_OFF = 64       # 1 value
_B3_OFF = 65       # 1 value
_N_PARAMS = 66


def _mlp_kernel(p_ref, x_ref, o_ref):
    # p_ref: (66,) f32 in SMEM -- every weight/bias read as a scalar.
    # x_ref: (7, TILE_B) f32 in VMEM -- batch on the 128-lane axis.
    # o_ref: (1, TILE_B) f32 in VMEM -- lane-dense output block.
    xs = [x_ref[pl.ds(i, 1), :] for i in range(7)]        # 7 x (1, TILE_B)

    # Linear(7,7): h_j = sum_i W1[j,i] * x_i + b1[j]   (broadcast FMAs, VPU only)
    hs = []
    for j in range(7):
        h = xs[0] * p_ref[_W1_OFF + 7 * j + 0]
        for i in range(1, 7):
            h = h + xs[i] * p_ref[_W1_OFF + 7 * j + i]
        hs.append(h + p_ref[_B1_OFF + j])

    # Softmax over the 7 features, fused with Linear(7,1):
    #   num = sum_j exp(h_j - m) * W2[j],  den = sum_j exp(h_j - m)
    m = hs[0]
    for j in range(1, 7):
        m = jnp.maximum(m, hs[j])
    num = jnp.zeros_like(m)
    den = jnp.zeros_like(m)
    for j in range(7):
        e = jnp.exp(hs[j] - m)
        den = den + e
        num = num + e * p_ref[_W2_OFF + j]
    z = num * pl.reciprocal(den, approx=True) + p_ref[_B2_OFF]

    # Sigmoid, then Linear(1,1) as a scalar FMA.
    s = jax.nn.sigmoid(z)
    o_ref[...] = (s * p_ref[_W3_OFF] + p_ref[_B3_OFF]).astype(o_ref.dtype)


def neural_network_forward(x, params, *, max_tile_b=2048):
    """x: (B, 7) float32. params: dict of W1,b1,W2,b2,W3,b3 (PyTorch shapes)."""
    B, F = x.shape
    assert F == 7
    x = x.astype(jnp.float32)

    # Pack all weights/biases into one flat vector that lives in SMEM.
    p = jnp.concatenate([
        params["W1"].reshape(-1),
        params["b1"].reshape(-1),
        params["W2"].reshape(-1),
        params["b2"].reshape(-1),
        params["W3"].reshape(-1),
        params["b3"].reshape(-1),
    ]).astype(jnp.float32)
    assert p.shape == (_N_PARAMS,)

    # Batch-on-lanes layout: (7, B), lane dim padded to a multiple of the tile.
    def _round_up(a, m):
        return ((a + m - 1) // m) * m

    tile_b = min(max_tile_b, _round_up(B, 128))
    b_pad = _round_up(B, tile_b)
    xt = jnp.pad(x.T, ((0, 0), (0, b_pad - B)))           # (7, b_pad)

    out = pl.pallas_call(
        _mlp_kernel,
        out_shape=jax.ShapeDtypeStruct((1, b_pad), jnp.float32),
        grid=(b_pad // tile_b,),
        in_specs=[
            pl.BlockSpec(memory_space=pltpu.MemorySpace.SMEM),   # packed params
            pl.BlockSpec((7, tile_b), lambda b: (0, b)),         # x tile (batch on lanes)
        ],
        out_specs=pl.BlockSpec((1, tile_b), lambda b: (0, b)),
        compiler_params=pltpu.CompilerParams(
            dimension_semantics=("parallel",),   # shards batch grid across v7x's 2 TCs
            vmem_limit_bytes=32 * 1024 * 1024,
        ),
    )(p, xt)

    return out[:, :B].T                                    # (B, 1)


def init_params(key):
    """Deterministic PyTorch-style (Kaiming-uniform-ish) init for the 3 Linears."""
    ks = jax.random.split(key, 6)

    def lin_init(kw, kb, fan_in, fan_out):
        bound = 1.0 / jnp.sqrt(fan_in)
        W = jax.random.uniform(kw, (fan_out, fan_in), jnp.float32, -bound, bound)
        b = jax.random.uniform(kb, (fan_out,), jnp.float32, -bound, bound)
        return W, b

    W1, b1 = lin_init(ks[0], ks[1], 7, 7)
    W2, b2 = lin_init(ks[2], ks[3], 7, 1)
    W3, b3 = lin_init(ks[4], ks[5], 1, 1)
    return {"W1": W1, "b1": b1, "W2": W2, "b2": b2, "W3": W3, "b3": b3}


def reference_forward(x, p):
    """Plain-JAX reference mirroring the PyTorch module exactly."""
    h = x @ p["W1"].T + p["b1"]
    h = jax.nn.softmax(h, axis=-1)
    h = h @ p["W2"].T + p["b2"]
    h = jax.nn.sigmoid(h)
    h = h @ p["W3"].T + p["b3"]
    return h


if __name__ == "__main__":
    key = jax.random.PRNGKey(0)
    k_param, k_x1, k_x2 = jax.random.split(key, 3)

    params = init_params(k_param)

    # Small batch (single tile after padding to 128 lanes).
    x1 = jax.random.normal(k_x1, (8, 7), dtype=jnp.float32)
    out1 = jax.block_until_ready(neural_network_forward(x1, params))
    ref1 = reference_forward(x1, params)
    assert out1.shape == (8, 1)
    # approx reciprocal in the fused softmax -> tolerance loosened vs exact path.
    assert jnp.allclose(out1, ref1, atol=2e-3, rtol=2e-3), (out1, ref1)

    # Slightly larger, non-multiple-of-128 batch exercising a multi-step grid.
    x2 = jax.random.normal(k_x2, (300, 7), dtype=jnp.float32)
    out2 = jax.block_until_ready(
        neural_network_forward(x2, params, max_tile_b=128))
    ref2 = reference_forward(x2, params)
    assert out2.shape == (300, 1)
    assert jnp.allclose(out2, ref2, atol=2e-3, rtol=2e-3)

    print("KERNEL_OK")
</pallas_src>

<mosaic_0001>
module attributes {stable_mosaic.version = 11 : i64} {
  func.func @_mlp_kernel(%arg0: i32, %arg1: memref<66xf32, #tpu.memory_space<smem>>, %arg2: memref<7x128xf32, #tpu.memory_space<vmem>>, %arg3: memref<1x128xf32, #tpu.memory_space<vmem>>) attributes {dimension_semantics = [#tpu.dimension_semantics<parallel>], iteration_bounds = array<i64: 1>, scalar_prefetch = 0 : i64, scratch_operands = 0 : i64, tpu.core_type = #tpu.core_type<tc>, window_params = [{transform_indices = @transform_0, window_bounds = array<i64: 66>}, {transform_indices = @transform_1, window_bounds = array<i64: 7, 128>}, {transform_indices = @transform_2, window_bounds = array<i64: 1, 128>}]} {
    %c0 = arith.constant 0 : index
    %c0_0 = arith.constant 0 : index
    %0 = vector.load %arg2[%c0, %c0_0] : memref<7x128xf32, #tpu.memory_space<vmem>>, vector<1x128xf32>
    %c1 = arith.constant 1 : index
    %c0_1 = arith.constant 0 : index
    %1 = vector.load %arg2[%c1, %c0_1] : memref<7x128xf32, #tpu.memory_space<vmem>>, vector<1x128xf32>
    %c2 = arith.constant 2 : index
    %c0_2 = arith.constant 0 : index
    %2 = vector.load %arg2[%c2, %c0_2] : memref<7x128xf32, #tpu.memory_space<vmem>>, vector<1x128xf32>
    %c3 = arith.constant 3 : index
    %c0_3 = arith.constant 0 : index
    %3 = vector.load %arg2[%c3, %c0_3] : memref<7x128xf32, #tpu.memory_space<vmem>>, vector<1x128xf32>
    %c4 = arith.constant 4 : index
    %c0_4 = arith.constant 0 : index
    %4 = vector.load %arg2[%c4, %c0_4] : memref<7x128xf32, #tpu.memory_space<vmem>>, vector<1x128xf32>
    %c5 = arith.constant 5 : index
    %c0_5 = arith.constant 0 : index
    %5 = vector.load %arg2[%c5, %c0_5] : memref<7x128xf32, #tpu.memory_space<vmem>>, vector<1x128xf32>
    %c6 = arith.constant 6 : index
    %c0_6 = arith.constant 0 : index
    %6 = vector.load %arg2[%c6, %c0_6] : memref<7x128xf32, #tpu.memory_space<vmem>>, vector<1x128xf32>
    %c0_7 = arith.constant 0 : index
    %7 = memref.load %arg1[%c0_7] : memref<66xf32, #tpu.memory_space<smem>>
    %8 = vector.broadcast %7 : f32 to vector<1x128xf32>
    %9 = arith.mulf %0, %8 : vector<1x128xf32>
    %c1_8 = arith.constant 1 : index
    %10 = memref.load %arg1[%c1_8] : memref<66xf32, #tpu.memory_space<smem>>
    %11 = vector.broadcast %10 : f32 to vector<1x128xf32>
    %12 = arith.mulf %1, %11 : vector<1x128xf32>
    %13 = arith.addf %9, %12 : vector<1x128xf32>
    %c2_9 = arith.constant 2 : index
    %14 = memref.load %arg1[%c2_9] : memref<66xf32, #tpu.memory_space<smem>>
    %15 = vector.broadcast %14 : f32 to vector<1x128xf32>
    %16 = arith.mulf %2, %15 : vector<1x128xf32>
    %17 = arith.addf %13, %16 : vector<1x128xf32>
    %c3_10 = arith.constant 3 : index
    %18 = memref.load %arg1[%c3_10] : memref<66xf32, #tpu.memory_space<smem>>
    %19 = vector.broadcast %18 : f32 to vector<1x128xf32>
    %20 = arith.mulf %3, %19 : vector<1x128xf32>
    %21 = arith.addf %17, %20 : vector<1x128xf32>
    %c4_11 = arith.constant 4 : index
    %22 = memref.load %arg1[%c4_11] : memref<66xf32, #tpu.memory_space<smem>>
    %23 = vector.broadcast %22 : f32 to vector<1x128xf32>
    %24 = arith.mulf %4, %23 : vector<1x128xf32>
    %25 = arith.addf %21, %24 : vector<1x128xf32>
    %c5_12 = arith.constant 5 : index
    %26 = memref.load %arg1[%c5_12] : memref<66xf32, #tpu.memory_space<smem>>
    %27 = vector.broadcast %26 : f32 to vector<1x128xf32>
    %28 = arith.mulf %5, %27 : vector<1x128xf32>
    %29 = arith.addf %25, %28 : vector<1x128xf32>
    %c6_13 = arith.constant 6 : index
    %30 = memref.load %arg1[%c6_13] : memref<66xf32, #tpu.memory_space<smem>>
    %31 = vector.broadcast %30 : f32 to vector<1x128xf32>
    %32 = arith.mulf %6, %31 : vector<1x128xf32>
    %33 = arith.addf %29, %32 : vector<1x128xf32>
    %c49 = arith.constant 49 : index
    %34 = memref.load %arg1[%c49] : memref<66xf32, #tpu.memory_space<smem>>
    %35 = vector.broadcast %34 : f32 to vector<1x128xf32>
    %36 = arith.addf %33, %35 : vector<1x128xf32>
    %c7 = arith.constant 7 : index
    %37 = memref.load %arg1[%c7] : memref<66xf32, #tpu.memory_space<smem>>
    %38 = vector.broadcast %37 : f32 to vector<1x128xf32>
    %39 = arith.mulf %0, %38 : vector<1x128xf32>
    %c8 = arith.constant 8 : index
    %40 = memref.load %arg1[%c8] : memref<66xf32, #tpu.memory_space<smem>>
    %41 = vector.broadcast %40 : f32 to vector<1x128xf32>
    %42 = arith.mulf %1, %41 : vector<1x128xf32>
    %43 = arith.addf %39, %42 : vector<1x128xf32>
    %c9 = arith.constant 9 : index
    %44 = memref.load %arg1[%c9] : memref<66xf32, #tpu.memory_space<smem>>
    %45 = vector.broadcast %44 : f32 to vector<1x128xf32>
    %46 = arith.mulf %2, %45 : vector<1x128xf32>
    %47 = arith.addf %43, %46 : vector<1x128xf32>
    %c10 = arith.constant 10 : index
    %48 = memref.load %arg1[%c10] : memref<66xf32, #tpu.memory_space<smem>>
    %49 = vector.broadcast %48 : f32 to vector<1x128xf32>
    %50 = arith.mulf %3, %49 : vector<1x128xf32>
    %51 = arith.addf %47, %50 : vector<1x128xf32>
    %c11 = arith.constant 11 : index
    %52 = memref.load %arg1[%c11] : memref<66xf32, #tpu.memory_space<smem>>
    %53 = vector.broadcast %52 : f32 to vector<1x128xf32>
    %54 = arith.mulf %4, %53 : vector<1x128xf32>
    %55 = arith.addf %51, %54 : vector<1x128xf32>
    %c12 = arith.constant 12 : index
    %56 = memref.load %arg1[%c12] : memref<66xf32, #tpu.memory_space<smem>>
    %57 = vector.broadcast %56 : f32 to vector<1x128xf32>
    %58 = arith.mulf %5, %57 : vector<1x128xf32>
    %59 = arith.addf %55, %58 : vector<1x128xf32>
    %c13 = arith.constant 13 : index
    %60 = memref.load %arg1[%c13] : memref<66xf32, #tpu.memory_space<smem>>
    %61 = vector.broadcast %60 : f32 to vector<1x128xf32>
    %62 = arith.mulf %6, %61 : vector<1x128xf32>
    %63 = arith.addf %59, %62 : vector<1x128xf32>
    %c50 = arith.constant 50 : index
    %64 = memref.load %arg1[%c50] : memref<66xf32, #tpu.memory_space<smem>>
    %65 = vector.broadcast %64 : f32 to vector<1x128xf32>
    %66 = arith.addf %63, %65 : vector<1x128xf32>
    %c14 = arith.constant 14 : index
    %67 = memref.load %arg1[%c14] : memref<66xf32, #tpu.memory_space<smem>>
    %68 = vector.broadcast %67 : f32 to vector<1x128xf32>
    %69 = arith.mulf %0, %68 : vector<1x128xf32>
    %c15 = arith.constant 15 : index
    %70 = memref.load %arg1[%c15] : memref<66xf32, #tpu.memory_space<smem>>
    %71 = vector.broadcast %70 : f32 to vector<1x128xf32>
    %72 = arith.mulf %1, %71 : vector<1x128xf32>
    %73 = arith.addf %69, %72 : vector<1x128xf32>
    %c16 = arith.constant 16 : index
    %74 = memref.load %arg1[%c16] : memref<66xf32, #tpu.memory_space<smem>>
    %75 = vector.broadcast %74 : f32 to vector<1x128xf32>
    %76 = arith.mulf %2, %75 : vector<1x128xf32>
    %77 = arith.addf %73, %76 : vector<1x128xf32>
    %c17 = arith.constant 17 : index
    %78 = memref.load %arg1[%c17] : memref<66xf32, #tpu.memory_space<smem>>
    %79 = vector.broadcast %78 : f32 to vector<1x128xf32>
    %80 = arith.mulf %3, %79 : vector<1x128xf32>
    %81 = arith.addf %77, %80 : vector<1x128xf32>
    %c18 = arith.constant 18 : index
    %82 = memref.load %arg1[%c18] : memref<66xf32, #tpu.memory_space<smem>>
    %83 = vector.broadcast %82 : f32 to vector<1x128xf32>
    %84 = arith.mulf %4, %83 : vector<1x128xf32>
    %85 = arith.addf %81, %84 : vector<1x128xf32>
    %c19 = arith.constant 19 : index
    %86 = memref.load %arg1[%c19] : memref<66xf32, #tpu.memory_space<smem>>
    %87 = vector.broadcast %86 : f32 to vector<1x128xf32>
    %88 = arith.mulf %5, %87 : vector<1x128xf32>
    %89 = arith.addf %85, %88 : vector<1x128xf32>
    %c20 = arith.constant 20 : index
    %90 = memref.load %arg1[%c20] : memref<66xf32, #tpu.memory_space<smem>>
    %91 = vector.broadcast %90 : f32 to vector<1x128xf32>
    %92 = arith.mulf %6, %91 : vector<1x128xf32>
    %93 = arith.addf %89, %92 : vector<1x128xf32>
    %c51 = arith.constant 51 : index
    %94 = memref.load %arg1[%c51] : memref<66xf32, #tpu.memory_space<smem>>
    %95 = vector.broadcast %94 : f32 to vector<1x128xf32>
    %96 = arith.addf %93, %95 : vector<1x128xf32>
    %c21 = arith.constant 21 : index
    %97 = memref.load %arg1[%c21] : memref<66xf32, #tpu.memory_space<smem>>
    %98 = vector.broadcast %97 : f32 to vector<1x128xf32>
    %99 = arith.mulf %0, %98 : vector<1x128xf32>
    %c22 = arith.constant 22 : index
    %100 = memref.load %arg1[%c22] : memref<66xf32, #tpu.memory_space<smem>>
    %101 = vector.broadcast %100 : f32 to vector<1x128xf32>
    %102 = arith.mulf %1, %101 : vector<1x128xf32>
    %103 = arith.addf %99, %102 : vector<1x128xf32>
    %c23 = arith.constant 23 : index
    %104 = memref.load %arg1[%c23] : memref<66xf32, #tpu.memory_space<smem>>
    %105 = vector.broadcast %104 : f32 to vector<1x128xf32>
    %106 = arith.mulf %2, %105 : vector<1x128xf32>
    %107 = arith.addf %103, %106 : vector<1x128xf32>
    %c24 = arith.constant 24 : index
    %108 = memref.load %arg1[%c24] : memref<66xf32, #tpu.memory_space<smem>>
    %109 = vector.broadcast %108 : f32 to vector<1x128xf32>
    %110 = arith.mulf %3, %109 : vector<1x128xf32>
    %111 = arith.addf %107, %110 : vector<1x128xf32>
    %c25 = arith.constant 25 : index
    %112 = memref.load %arg1[%c25] : memref<66xf32, #tpu.memory_space<smem>>
    %113 = vector.broadcast %112 : f32 to vector<1x128xf32>
    %114 = arith.mulf %4, %113 : vector<1x128xf32>
    %115 = arith.addf %111, %114 : vector<1x128xf32>
    %c26 = arith.constant 26 : index
    %116 = memref.load %arg1[%c26] : memref<66xf32, #tpu.memory_space<smem>>
    %117 = vector.broadcast %116 : f32 to vector<1x128xf32>
    %118 = arith.mulf %5, %117 : vector<1x128xf32>
    %119 = arith.addf %115, %118 : vector<1x128xf32>
    %c27 = arith.constant 27 : index
    %120 = memref.load %arg1[%c27] : memref<66xf32, #tpu.memory_space<smem>>
    %121 = vector.broadcast %120 : f32 to vector<1x128xf32>
    %122 = arith.mulf %6, %121 : vector<1x128xf32>
    %123 = arith.addf %119, %122 : vector<1x128xf32>
    %c52 = arith.constant 52 : index
    %124 = memref.load %arg1[%c52] : memref<66xf32, #tpu.memory_space<smem>>
    %125 = vector.broadcast %124 : f32 to vector<1x128xf32>
    %126 = arith.addf %123, %125 : vector<1x128xf32>
    %c28 = arith.constant 28 : index
    %127 = memref.load %arg1[%c28] : memref<66xf32, #tpu.memory_space<smem>>
    %128 = vector.broadcast %127 : f32 to vector<1x128xf32>
    %129 = arith.mulf %0, %128 : vector<1x128xf32>
    %c29 = arith.constant 29 : index
    %130 = memref.load %arg1[%c29] : memref<66xf32, #tpu.memory_space<smem>>
    %131 = vector.broadcast %130 : f32 to vector<1x128xf32>
    %132 = arith.mulf %1, %131 : vector<1x128xf32>
    %133 = arith.addf %129, %132 : vector<1x128xf32>
    %c30 = arith.constant 30 : index
    %134 = memref.load %arg1[%c30] : memref<66xf32, #tpu.memory_space<smem>>
    %135 = vector.broadcast %134 : f32 to vector<1x128xf32>
    %136 = arith.mulf %2, %135 : vector<1x128xf32>
    %137 = arith.addf %133, %136 : vector<1x128xf32>
    %c31 = arith.constant 31 : index
    %138 = memref.load %arg1[%c31] : memref<66xf32, #tpu.memory_space<smem>>
    %139 = vector.broadcast %138 : f32 to vector<1x128xf32>
    %140 = arith.mulf %3, %139 : vector<1x128xf32>
    %141 = arith.addf %137, %140 : vector<1x128xf32>
    %c32 = arith.constant 32 : index
    %142 = memref.load %arg1[%c32] : memref<66xf32, #tpu.memory_space<smem>>
    %143 = vector.broadcast %142 : f32 to vector<1x128xf32>
    %144 = arith.mulf %4, %143 : vector<1x128xf32>
    %145 = arith.addf %141, %144 : vector<1x128xf32>
    %c33 = arith.constant 33 : index
    %146 = memref.load %arg1[%c33] : memref<66xf32, #tpu.memory_space<smem>>
    %147 = vector.broadcast %146 : f32 to vector<1x128xf32>
    %148 = arith.mulf %5, %147 : vector<1x128xf32>
    %149 = arith.addf %145, %148 : vector<1x128xf32>
    %c34 = arith.constant 34 : index
    %150 = memref.load %arg1[%c34] : memref<66xf32, #tpu.memory_space<smem>>
    %151 = vector.broadcast %150 : f32 to vector<1x128xf32>
    %152 = arith.mulf %6, %151 : vector<1x128xf32>
    %153 = arith.addf %149, %152 : vector<1x128xf32>
    %c53 = arith.constant 53 : index
    %154 = memref.load %arg1[%c53] : memref<66xf32, #tpu.memory_space<smem>>
    %155 = vector.broadcast %154 : f32 to vector<1x128xf32>
    %156 = arith.addf %153, %155 : vector<1x128xf32>
    %c35 = arith.constant 35 : index
    %157 = memref.load %arg1[%c35] : memref<66xf32, #tpu.memory_space<smem>>
    %158 = vector.broadcast %157 : f32 to vector<1x128xf32>
    %159 = arith.mulf %0, %158 : vector<1x128xf32>
    %c36 = arith.constant 36 : index
    %160 = memref.load %arg1[%c36] : memref<66xf32, #tpu.memory_space<smem>>
    %161 = vector.broadcast %160 : f32 to vector<1x128xf32>
    %162 = arith.mulf %1, %161 : vector<1x128xf32>
    %163 = arith.addf %159, %162 : vector<1x128xf32>
    %c37 = arith.constant 37 : index
    %164 = memref.load %arg1[%c37] : memref<66xf32, #tpu.memory_space<smem>>
    %165 = vector.broadcast %164 : f32 to vector<1x128xf32>
    %166 = arith.mulf %2, %165 : vector<1x128xf32>
    %167 = arith.addf %163, %166 : vector<1x128xf32>
    %c38 = arith.constant 38 : index
    %168 = memref.load %arg1[%c38] : memref<66xf32, #tpu.memory_space<smem>>
    %169 = vector.broadcast %168 : f32 to vector<1x128xf32>
    %170 = arith.mulf %3, %169 : vector<1x128xf32>
    %171 = arith.addf %167, %170 : vector<1x128xf32>
    %c39 = arith.constant 39 : index
    %172 = memref.load %arg1[%c39] : memref<66xf32, #tpu.memory_space<smem>>
    %173 = vector.broadcast %172 : f32 to vector<1x128xf32>
    %174 = arith.mulf %4, %173 : vector<1x128xf32>
    %175 = arith.addf %171, %174 : vector<1x128xf32>
    %c40 = arith.constant 40 : index
    %176 = memref.load %arg1[%c40] : memref<66xf32, #tpu.memory_space<smem>>
    %177 = vector.broadcast %176 : f32 to vector<1x128xf32>
    %178 = arith.mulf %5, %177 : vector<1x128xf32>
    %179 = arith.addf %175, %178 : vector<1x128xf32>
    %c41 = arith.constant 41 : index
    %180 = memref.load %arg1[%c41] : memref<66xf32, #tpu.memory_space<smem>>
    %181 = vector.broadcast %180 : f32 to vector<1x128xf32>
    %182 = arith.mulf %6, %181 : vector<1x128xf32>
    %183 = arith.addf %179, %182 : vector<1x128xf32>
    %c54 = arith.constant 54 : index
    %184 = memref.load %arg1[%c54] : memref<66xf32, #tpu.memory_space<smem>>
    %185 = vector.broadcast %184 : f32 to vector<1x128xf32>
    %186 = arith.addf %183, %185 : vector<1x128xf32>
    %c42 = arith.constant 42 : index
    %187 = memref.load %arg1[%c42] : memref<66xf32, #tpu.memory_space<smem>>
    %188 = vector.broadcast %187 : f32 to vector<1x128xf32>
    %189 = arith.mulf %0, %188 : vector<1x128xf32>
    %c43 = arith.constant 43 : index
    %190 = memref.load %arg1[%c43] : memref<66xf32, #tpu.memory_space<smem>>
    %191 = vector.broadcast %190 : f32 to vector<1x128xf32>
    %192 = arith.mulf %1, %191 : vector<1x128xf32>
    %193 = arith.addf %189, %192 : vector<1x128xf32>
    %c44 = arith.constant 44 : index
    %194 = memref.load %arg1[%c44] : memref<66xf32, #tpu.memory_space<smem>>
    %195 = vector.broadcast %194 : f32 to vector<1x128xf32>
    %196 = arith.mulf %2, %195 : vector<1x128xf32>
    %197 = arith.addf %193, %196 : vector<1x128xf32>
    %c45 = arith.constant 45 : index
    %198 = memref.load %arg1[%c45] : memref<66xf32, #tpu.memory_space<smem>>
    %199 = vector.broadcast %198 : f32 to vector<1x128xf32>
    %200 = arith.mulf %3, %199 : vector<1x128xf32>
    %201 = arith.addf %197, %200 : vector<1x128xf32>
    %c46 = arith.constant 46 : index
    %202 = memref.load %arg1[%c46] : memref<66xf32, #tpu.memory_space<smem>>
    %203 = vector.broadcast %202 : f32 to vector<1x128xf32>
    %204 = arith.mulf %4, %203 : vector<1x128xf32>
    %205 = arith.addf %201, %204 : vector<1x128xf32>
    %c47 = arith.constant 47 : index
    %206 = memref.load %arg1[%c47] : memref<66xf32, #tpu.memory_space<smem>>
    %207 = vector.broadcast %206 : f32 to vector<1x128xf32>
    %208 = arith.mulf %5, %207 : vector<1x128xf32>
    %209 = arith.addf %205, %208 : vector<1x128xf32>
    %c48 = arith.constant 48 : index
    %210 = memref.load %arg1[%c48] : memref<66xf32, #tpu.memory_space<smem>>
    %211 = vector.broadcast %210 : f32 to vector<1x128xf32>
    %212 = arith.mulf %6, %211 : vector<1x128xf32>
    %213 = arith.addf %209, %212 : vector<1x128xf32>
    %c55 = arith.constant 55 : index
    %214 = memref.load %arg1[%c55] : memref<66xf32, #tpu.memory_space<smem>>
    %215 = vector.broadcast %214 : f32 to vector<1x128xf32>
    %216 = arith.addf %213, %215 : vector<1x128xf32>
    %217 = arith.maximumf %36, %66 : vector<1x128xf32>
    %218 = arith.maximumf %217, %96 : vector<1x128xf32>
    %219 = arith.maximumf %218, %126 : vector<1x128xf32>
    %220 = arith.maximumf %219, %156 : vector<1x128xf32>
    %221 = arith.maximumf %220, %186 : vector<1x128xf32>
    %222 = arith.maximumf %221, %216 : vector<1x128xf32>
    %cst = arith.constant 0.000000e+00 : f32
    %223 = vector.broadcast %cst : f32 to vector<1x128xf32>
    %cst_14 = arith.constant 0.000000e+00 : f32
    %224 = vector.broadcast %cst_14 : f32 to vector<1x128xf32>
    %225 = arith.subf %36, %222 : vector<1x128xf32>
    %226 = math.exp %225 : vector<1x128xf32>
    %227 = arith.addf %224, %226 : vector<1x128xf32>
    %c56 = arith.constant 56 : index
    %228 = memref.load %arg1[%c56] : memref<66xf32, #tpu.memory_space<smem>>
    %229 = vector.broadcast %228 : f32 to vector<1x128xf32>
    %230 = arith.mulf %226, %229 : vector<1x128xf32>
    %231 = arith.addf %223, %230 : vector<1x128xf32>
    %232 = arith.subf %66, %222 : vector<1x128xf32>
    %233 = math.exp %232 : vector<1x128xf32>
    %234 = arith.addf %227, %233 : vector<1x128xf32>
    %c57 = arith.constant 57 : index
    %235 = memref.load %arg1[%c57] : memref<66xf32, #tpu.memory_space<smem>>
    %236 = vector.broadcast %235 : f32 to vector<1x128xf32>
    %237 = arith.mulf %233, %236 : vector<1x128xf32>
    %238 = arith.addf %231, %237 : vector<1x128xf32>
    %239 = arith.subf %96, %222 : vector<1x128xf32>
    %240 = math.exp %239 : vector<1x128xf32>
    %241 = arith.addf %234, %240 : vector<1x128xf32>
    %c58 = arith.constant 58 : index
    %242 = memref.load %arg1[%c58] : memref<66xf32, #tpu.memory_space<smem>>
    %243 = vector.broadcast %242 : f32 to vector<1x128xf32>
    %244 = arith.mulf %240, %243 : vector<1x128xf32>
    %245 = arith.addf %238, %244 : vector<1x128xf32>
    %246 = arith.subf %126, %222 : vector<1x128xf32>
    %247 = math.exp %246 : vector<1x128xf32>
    %248 = arith.addf %241, %247 : vector<1x128xf32>
    %c59 = arith.constant 59 : index
    %249 = memref.load %arg1[%c59] : memref<66xf32, #tpu.memory_space<smem>>
    %250 = vector.broadcast %249 : f32 to vector<1x128xf32>
    %251 = arith.mulf %247, %250 : vector<1x128xf32>
    %252 = arith.addf %245, %251 : vector<1x128xf32>
    %253 = arith.subf %156, %222 : vector<1x128xf32>
    %254 = math.exp %253 : vector<1x128xf32>
    %255 = arith.addf %248, %254 : vector<1x128xf32>
    %c60 = arith.constant 60 : index
    %256 = memref.load %arg1[%c60] : memref<66xf32, #tpu.memory_space<smem>>
    %257 = vector.broadcast %256 : f32 to vector<1x128xf32>
    %258 = arith.mulf %254, %257 : vector<1x128xf32>
    %259 = arith.addf %252, %258 : vector<1x128xf32>
    %260 = arith.subf %186, %222 : vector<1x128xf32>
    %261 = math.exp %260 : vector<1x128xf32>
    %262 = arith.addf %255, %261 : vector<1x128xf32>
    %c61 = arith.constant 61 : index
    %263 = memref.load %arg1[%c61] : memref<66xf32, #tpu.memory_space<smem>>
    %264 = vector.broadcast %263 : f32 to vector<1x128xf32>
    %265 = arith.mulf %261, %264 : vector<1x128xf32>
    %266 = arith.addf %259, %265 : vector<1x128xf32>
    %267 = arith.subf %216, %222 : vector<1x128xf32>
    %268 = math.exp %267 : vector<1x128xf32>
    %269 = arith.addf %262, %268 : vector<1x128xf32>
    %c62 = arith.constant 62 : index
    %270 = memref.load %arg1[%c62] : memref<66xf32, #tpu.memory_space<smem>>
    %271 = vector.broadcast %270 : f32 to vector<1x128xf32>
    %272 = arith.mulf %268, %271 : vector<1x128xf32>
    %273 = arith.addf %266, %272 : vector<1x128xf32>
    %274 = tpu.reciprocal %269 {approx = true} : vector<1x128xf32> -> vector<1x128xf32>
    %275 = arith.mulf %273, %274 : vector<1x128xf32>
    %c63 = arith.constant 63 : index
    %276 = memref.load %arg1[%c63] : memref<66xf32, #tpu.memory_space<smem>>
    %277 = vector.broadcast %276 : f32 to vector<1x128xf32>
    %278 = arith.addf %275, %277 : vector<1x128xf32>
    %279 = arith.negf %278 : vector<1x128xf32>
    %280 = math.exp %279 : vector<1x128xf32>
    %cst_15 = arith.constant 1.000000e+00 : f32
    %281 = vector.broadcast %cst_15 : f32 to vector<1x128xf32>
    %282 = arith.addf %281, %280 : vector<1x128xf32>
    %283 = arith.divf %281, %282 : vector<1x128xf32>
    %c64 = arith.constant 64 : index
    %284 = memref.load %arg1[%c64] : memref<66xf32, #tpu.memory_space<smem>>
    %285 = vector.broadcast %284 : f32 to vector<1x128xf32>
    %286 = arith.mulf %283, %285 : vector<1x128xf32>
    %c65 = arith.constant 65 : index
    %287 = memref.load %arg1[%c65] : memref<66xf32, #tpu.memory_space<smem>>
    %288 = vector.broadcast %287 : f32 to vector<1x128xf32>
    %289 = arith.addf %286, %288 : vector<1x128xf32>
    %c0_16 = arith.constant 0 : index
    %c0_17 = arith.constant 0 : index
    %290 = vector.load %arg3[%c0_16, %c0_17] : memref<1x128xf32, #tpu.memory_space<vmem>>, vector<1x128xf32>
    tpu.vector_store %arg3[%c0_16, %c0_17], %289 {strides = array<i32>} : memref<1x128xf32, #tpu.memory_space<vmem>>, vector<1x128xf32>,
    return
  }
  func.func @transform_0(%arg0: i32) -> i32 {
    %c0_i32 = arith.constant 0 : i32
    %c0_i32_0 = arith.constant 0 : i32
    return %c0_i32 : i32
  }
  func.func @transform_1(%arg0: i32) -> (i32, i32) {
    %c0_i32 = arith.constant 0 : i32
    %c0_i32_0 = arith.constant 0 : i32
    return %c0_i32, %arg0 : i32, i32
  }
  func.func @transform_2(%arg0: i32) -> (i32, i32) {
    %c0_i32 = arith.constant 0 : i32
    %c0_i32_0 = arith.constant 0 : i32
    return %c0_i32, %arg0 : i32, i32
  }
}

</mosaic_0001>

<llo_original>
// kernel: tpu_custom_call.1
$region0: #{tpu_custom_call.1}
  #allocation0 [shape = 'u32[]', space=smem, size = 0x4, offset = 0x4, fixed_abs, tag = 'smem constant byte address 0x4 - core index']
  #allocation1 [shape = 'u32[144,128]{1,0:T(1,128)}', space=vmem, size = 0x12000, scoped, tag = 'internal scratch']
  %s0 = inlined_call_operand.hbm [shape: f32[66], index: 0, kind: input, shape index: {}]
  %s1 = inlined_call_operand.hbm [shape: f32[7,128], index: 1, kind: input, shape index: {}]
  %s2 = inlined_call_operand.hbm [shape: f32[1,128], index: 2, kind: output, shape index: {}]
  %s3 = sld [smem:[#allocation0]]
  $region26: #{tpu_custom_call.1} parent=0
    _
  %s5 = ssub.s32 1, %s3
  %s6 = scalar_select 0, %s5, %s3
  $region1: #{tpu_custom_call.1} parent=0
    #allocation2 [shape = 'u8[512]{0}', space=smem, size = 0x200, scoped, tag = 'input window, operand 0, single buffered']
    #allocation3 [shape = 's32[1]{0}', space=sflag, size = 0x4, scoped, tag = 'scoped memory for tpu_custom_call.1']
    #allocation4 [shape = 's32[1]{0}', space=sflag, size = 0x4, scoped, tag = 'scoped memory for tpu_custom_call.1']
    #allocation5 [shape = 's32[1]{0}', space=sflag, size = 0x4, scoped, tag = 'scoped memory for tpu_custom_call.1']
    #allocation6 [shape = 'u8[4096]{0}', space=vmem, size = 0x1000, scoped, tag = 'input window, operand 1, single buffered']
    #allocation7 [shape = 'u8[512]{0}', space=vmem, size = 0x400, scoped, tag = 'output window, operand 0, single buffered']
    %7 = vsyncpa [#allocation5], 0
    %8 = vsyncpa [#allocation3], 0
    %9 = vsyncpa [#allocation4], 0
    // Predicated region
    $region2: #{tpu_custom_call.1} parent=1 // pred_check
      _
    $region3: #{tpu_custom_call.1} parent=1 // pred_check_branch
      %11 = sbr.rel (0) target = $region5
    $region4: #{tpu_custom_call.1} parent=1 // pred_region
      %s13 = ssub.s32 16, 16
      %14 = vsyncadd [#allocation5], %s13
      %17 = dma.hbm_to_smem %s0, 16, [#allocation2], [#allocation5]
    $region5: #{tpu_custom_call.1} parent=1 // pred_fallthru
      _
    // Predicated region
    $region6: #{tpu_custom_call.1} parent=1 // pred_check
      _
    $region7: #{tpu_custom_call.1} parent=1 // pred_check_branch
      %19 = sbr.rel (0) target = $region9
    $region8: #{tpu_custom_call.1} parent=1 // pred_region
      %s21 = ssub.s32 128, 128
      %22 = vsyncadd [#allocation3], %s21
      %s24 = sshll.u32 [#allocation6], 4
      %s25 = int_to_ptr.vmem [resolvable:$true] %s24
      %27 = dma.hbm_to_vmem [thread:$0]  %s1, 128, %s25, [#allocation3]
    $region9: #{tpu_custom_call.1} parent=1 // pred_fallthru
      _
    // Predicated region
    $region10: #{tpu_custom_call.1} parent=1 // pred_check
      _
    $region11: #{tpu_custom_call.1} parent=1 // pred_check_branch
      %29 = sbr.rel (0) target = $region13
    $region12: #{tpu_custom_call.1} parent=1 // pred_region
      %30 = dma.done [#allocation5], 16
    $region13: #{tpu_custom_call.1} parent=1 // pred_fallthru
      _
    // Predicated region
    $region14: #{tpu_custom_call.1} parent=1 // pred_check
      _
    $region15: #{tpu_custom_call.1} parent=1 // pred_check_branch
      %32 = sbr.rel (0) target = $region17
    $region16: #{tpu_custom_call.1} parent=1 // pred_region
      %33 = dma.done [#allocation3], 128
    $region17: #{tpu_custom_call.1} parent=1 // pred_fallthru
      _
    %34 = sfence
    %v35 = vld [vmem:[#allocation6] sm:$0x1]
    %v36 = vld [vmem:[#allocation6 + $0x1] sm:$0x1]
    %v37 = vld [vmem:[#allocation6 + $0x2] sm:$0x1]
    %v38 = vld [vmem:[#allocation6 + $0x3] sm:$0x1]
    %v39 = vld [vmem:[#allocation6 + $0x4] sm:$0x1]
    %v40 = vld [vmem:[#allocation6 + $0x5] sm:$0x1]
    %v41 = vld [vmem:[#allocation6 + $0x6] sm:$0x1]
    %s42 = sld [smem:[#allocation2]]
    %v43 = vstv %s42
    %v44 = vmul.f32 %v35, %v43
    %s45 = sld [smem:[#allocation2 + $0x1]]
    %v46 = vstv %s45
    %v47 = vmul.f32 %v36, %v46
    %v48 = vadd.f32 %v44, %v47
    %s49 = sld [smem:[#allocation2 + $0x2]]
    %v50 = vstv %s49
    %v51 = vmul.f32 %v37, %v50
    %v52 = vadd.f32 %v48, %v51
    %s53 = sld [smem:[#allocation2 + $0x3]]
    %v54 = vstv %s53
    %v55 = vmul.f32 %v38, %v54
    %v56 = vadd.f32 %v52, %v55
    %s57 = sld [smem:[#allocation2 + $0x4]]
    %v58 = vstv %s57
    %v59 = vmul.f32 %v39, %v58
    %v60 = vadd.f32 %v56, %v59
    %s61 = sld [smem:[#allocation2 + $0x5]]
    %v62 = vstv %s61
    %v63 = vmul.f32 %v40, %v62
    %v64 = vadd.f32 %v60, %v63
    %s65 = sld [smem:[#allocation2 + $0x6]]
    %v66 = vstv %s65
    %v67 = vmul.f32 %v41, %v66
    %v68 = vadd.f32 %v64, %v67
    %s69 = sld [smem:[#allocation2 + $0x31]]
    %v70 = vstv %s69
    %v71 = vadd.f32 %v68, %v70
    %s72 = sld [smem:[#allocation2 + $0x7]]
    %v73 = vstv %s72
    %v74 = vmul.f32 %v35, %v73
    %s75 = sld [smem:[#allocation2 + $0x8]]
    %v76 = vstv %s75
    %v77 = vmul.f32 %v36, %v76
    %v78 = vadd.f32 %v74, %v77
    %s79 = sld [smem:[#allocation2 + $0x9]]
    %v80 = vstv %s79
    %v81 = vmul.f32 %v37, %v80
    %v82 = vadd.f32 %v78, %v81
    %s83 = sld [smem:[#allocation2 + $0xa]]
    %v84 = vstv %s83
    %v85 = vmul.f32 %v38, %v84
    %v86 = vadd.f32 %v82, %v85
    %s87 = sld [smem:[#allocation2 + $0xb]]
    %v88 = vstv %s87
    %v89 = vmul.f32 %v39, %v88
    %v90 = vadd.f32 %v86, %v89
    %s91 = sld [smem:[#allocation2 + $0xc]]
    %v92 = vstv %s91
    %v93 = vmul.f32 %v40, %v92
    %v94 = vadd.f32 %v90, %v93
    %s95 = sld [smem:[#allocation2 + $0xd]]
    %v96 = vstv %s95
    %v97 = vmul.f32 %v41, %v96
    %v98 = vadd.f32 %v94, %v97
    %s99 = sld [smem:[#allocation2 + $0x32]]
    %v100 = vstv %s99
    %v101 = vadd.f32 %v98, %v100
    %s102 = sld [smem:[#allocation2 + $0xe]]
    %v103 = vstv %s102
    %v104 = vmul.f32 %v35, %v103
    %s105 = sld [smem:[#allocation2 + $0xf]]
    %v106 = vstv %s105
    %v107 = vmul.f32 %v36, %v106
    %v108 = vadd.f32 %v104, %v107
    %s109 = sld [smem:[#allocation2 + $0x10]]
    %v110 = vstv %s109
    %v111 = vmul.f32 %v37, %v110
    %v112 = vadd.f32 %v108, %v111
    %s113 = sld [smem:[#allocation2 + $0x11]]
    %v114 = vstv %s113
    %v115 = vmul.f32 %v38, %v114
    %v116 = vadd.f32 %v112, %v115
    %s117 = sld [smem:[#allocation2 + $0x12]]
    %v118 = vstv %s117
    %v119 = vmul.f32 %v39, %v118
    %v120 = vadd.f32 %v116, %v119
    %s121 = sld [smem:[#allocation2 + $0x13]]
    %v122 = vstv %s121
    %v123 = vmul.f32 %v40, %v122
    %v124 = vadd.f32 %v120, %v123
    %s125 = sld [smem:[#allocation2 + $0x14]]
    %v126 = vstv %s125
    %v127 = vmul.f32 %v41, %v126
    %v128 = vadd.f32 %v124, %v127
    %s129 = sld [smem:[#allocation2 + $0x33]]
    %v130 = vstv %s129
    %v131 = vadd.f32 %v128, %v130
    %s132 = sld [smem:[#allocation2 + $0x15]]
    %v133 = vstv %s132
    %v134 = vmul.f32 %v35, %v133
    %s135 = sld [smem:[#allocation2 + $0x16]]
    %v136 = vstv %s135
    %v137 = vmul.f32 %v36, %v136
    %v138 = vadd.f32 %v134, %v137
    %s139 = sld [smem:[#allocation2 + $0x17]]
    %v140 = vstv %s139
    %v141 = vmul.f32 %v37, %v140
    %v142 = vadd.f32 %v138, %v141
    %s143 = sld [smem:[#allocation2 + $0x18]]
    %v144 = vstv %s143
    %v145 = vmul.f32 %v38, %v144
    %v146 = vadd.f32 %v142, %v145
    %s147 = sld [smem:[#allocation2 + $0x19]]
    %v148 = vstv %s147
    %v149 = vmul.f32 %v39, %v148
    %v150 = vadd.f32 %v146, %v149
    %s151 = sld [smem:[#allocation2 + $0x1a]]
    %v152 = vstv %s151
    %v153 = vmul.f32 %v40, %v152
    %v154 = vadd.f32 %v150, %v153
    %s155 = sld [smem:[#allocation2 + $0x1b]]
    %v156 = vstv %s155
    %v157 = vmul.f32 %v41, %v156
    %v158 = vadd.f32 %v154, %v157
    %s159 = sld [smem:[#allocation2 + $0x34]]
    %v160 = vstv %s159
    %v161 = vadd.f32 %v158, %v160
    %s162 = sld [smem:[#allocation2 + $0x1c]]
    %v163 = vstv %s162
    %v164 = vmul.f32 %v35, %v163
    %s165 = sld [smem:[#allocation2 + $0x1d]]
    %v166 = vstv %s165
    %v167 = vmul.f32 %v36, %v166
    %v168 = vadd.f32 %v164, %v167
    %s169 = sld [smem:[#allocation2 + $0x1e]]
    %v170 = vstv %s169
    %v171 = vmul.f32 %v37, %v170
    %v172 = vadd.f32 %v168, %v171
    %s173 = sld [smem:[#allocation2 + $0x1f]]
    %v174 = vstv %s173
    %v175 = vmul.f32 %v38, %v174
    %v176 = vadd.f32 %v172, %v175
    %s177 = sld [smem:[#allocation2 + $0x20]]
    %v178 = vstv %s177
    %v179 = vmul.f32 %v39, %v178
    %v180 = vadd.f32 %v176, %v179
    %s181 = sld [smem:[#allocation2 + $0x21]]
    %v182 = vstv %s181
    %v183 = vmul.f32 %v40, %v182
    %v184 = vadd.f32 %v180, %v183
    %s185 = sld [smem:[#allocation2 + $0x22]]
    %v186 = vstv %s185
    %v187 = vmul.f32 %v41, %v186
    %v188 = vadd.f32 %v184, %v187
    %s189 = sld [smem:[#allocation2 + $0x35]]
    %v190 = vstv %s189
    %v191 = vadd.f32 %v188, %v190
    %s192 = sld [smem:[#allocation2 + $0x23]]
    %v193 = vstv %s192
    %v194 = vmul.f32 %v35, %v193
    %s195 = sld [smem:[#allocation2 + $0x24]]
    %v196 = vstv %s195
    %v197 = vmul.f32 %v36, %v196
    %v198 = vadd.f32 %v194, %v197
    %s199 = sld [smem:[#allocation2 + $0x25]]
    %v200 = vstv %s199
    %v201 = vmul.f32 %v37, %v200
    %v202 = vadd.f32 %v198, %v201
    %s203 = sld [smem:[#allocation2 + $0x26]]
    %v204 = vstv %s203
    %v205 = vmul.f32 %v38, %v204
    %v206 = vadd.f32 %v202, %v205
    %s207 = sld [smem:[#allocation2 + $0x27]]
    %v208 = vstv %s207
    %v209 = vmul.f32 %v39, %v208
    %v210 = vadd.f32 %v206, %v209
    %s211 = sld [smem:[#allocation2 + $0x28]]
    %v212 = vstv %s211
    %v213 = vmul.f32 %v40, %v212
    %v214 = vadd.f32 %v210, %v213
    %s215 = sld [smem:[#allocation2 + $0x29]]
    %v216 = vstv %s215
    %v217 = vmul.f32 %v41, %v216
    %v218 = vadd.f32 %v214, %v217
    %s219 = sld [smem:[#allocation2 + $0x36]]
    %v220 = vstv %s219
    %v221 = vadd.f32 %v218, %v220
    %s222 = sld [smem:[#allocation2 + $0x2a]]
    %v223 = vstv %s222
    %v224 = vmul.f32 %v35, %v223
    %s225 = sld [smem:[#allocation2 + $0x2b]]
    %v226 = vstv %s225
    %v227 = vmul.f32 %v36, %v226
    %v228 = vadd.f32 %v224, %v227
    %s229 = sld [smem:[#allocation2 + $0x2c]]
    %v230 = vstv %s229
    %v231 = vmul.f32 %v37, %v230
    %v232 = vadd.f32 %v228, %v231
    %s233 = sld [smem:[#allocation2 + $0x2d]]
    %v234 = vstv %s233
    %v235 = vmul.f32 %v38, %v234
    %v236 = vadd.f32 %v232, %v235
    %s237 = sld [smem:[#allocation2 + $0x2e]]
    %v238 = vstv %s237
    %v239 = vmul.f32 %v39, %v238
    %v240 = vadd.f32 %v236, %v239
    %s241 = sld [smem:[#allocation2 + $0x2f]]
    %v242 = vstv %s241
    %v243 = vmul.f32 %v40, %v242
    %v244 = vadd.f32 %v240, %v243
    %s245 = sld [smem:[#allocation2 + $0x30]]
    %v246 = vstv %s245
    %v247 = vmul.f32 %v41, %v246
    %v248 = vadd.f32 %v244, %v247
    %s249 = sld [smem:[#allocation2 + $0x37]]
    %v250 = vstv %s249
    %v251 = vadd.f32 %v248, %v250
    %v252 = vmax.f32 %v71, %v101
    %v253 = vmax.f32 %v252, %v131
    %v254 = vmax.f32 %v253, %v161
    %v255 = vmax.f32 %v254, %v191
    %v256 = vmax.f32 %v255, %v221
    %v257 = vmax.f32 %v256, %v251
    %v258 = vsub.f32 %v71, %v257
    %v259 = vmul.f32 %v258, 1.442695
    %v260 = vpow.pop %v259
    %v261 = vadd.f32 %v260, 0.0
    %s262 = sld [smem:[#allocation2 + $0x38]]
    %v263 = vstv %s262
    %v264 = vmul.f32 %v260, %v263
    %v265 = vadd.f32 %v264, 0.0
    %v266 = vsub.f32 %v101, %v257
    %v267 = vmul.f32 %v266, 1.442695
    %v268 = vpow.pop %v267
    %v269 = vadd.f32 %v261, %v268
    %s270 = sld [smem:[#allocation2 + $0x39]]
    %v271 = vstv %s270
    %v272 = vmul.f32 %v268, %v271
    %v273 = vadd.f32 %v265, %v272
    %v274 = vsub.f32 %v131, %v257
    %v275 = vmul.f32 %v274, 1.442695
    %v276 = vpow.pop %v275
    %v277 = vadd.f32 %v269, %v276
    %s278 = sld [smem:[#allocation2 + $0x3a]]
    %v279 = vstv %s278
    %v280 = vmul.f32 %v276, %v279
    %v281 = vadd.f32 %v273, %v280
    %v282 = vsub.f32 %v161, %v257
    %v283 = vmul.f32 %v282, 1.442695
    %v284 = vpow.pop %v283
    %v285 = vadd.f32 %v277, %v284
    %s286 = sld [smem:[#allocation2 + $0x3b]]
    %v287 = vstv %s286
    %v288 = vmul.f32 %v284, %v287
    %v289 = vadd.f32 %v281, %v288
    %v290 = vsub.f32 %v191, %v257
    %v291 = vmul.f32 %v290, 1.442695
    %v292 = vpow.pop %v291
    %v293 = vadd.f32 %v285, %v292
    %s294 = sld [smem:[#allocation2 + $0x3c]]
    %v295 = vstv %s294
    %v296 = vmul.f32 %v292, %v295
    %v297 = vadd.f32 %v289, %v296
    %v298 = vsub.f32 %v221, %v257
    %v299 = vmul.f32 %v298, 1.442695
    %v300 = vpow.pop %v299
    %v301 = vadd.f32 %v293, %v300
    %s302 = sld [smem:[#allocation2 + $0x3d]]
    %v303 = vstv %s302
    %v304 = vmul.f32 %v300, %v303
    %v305 = vadd.f32 %v297, %v304
    %v306 = vsub.f32 %v251, %v257
    %v307 = vmul.f32 %v306, 1.442695
    %v308 = vpow.pop %v307
    %v309 = vadd.f32 %v301, %v308
    %s310 = sld [smem:[#allocation2 + $0x3e]]
    %v311 = vstv %s310
    %v312 = vmul.f32 %v308, %v311
    %v313 = vadd.f32 %v305, %v312
    %v314 = vrcp.pop %v309
    %v315 = vmul.f32 %v313, %v314
    %s316 = sld [smem:[#allocation2 + $0x3f]]
    %v317 = vstv %s316
    %v318 = vadd.f32 %v315, %v317
    %v319 = vxor.u32 %v318, 2147483648
    %v320 = vmul.f32 %v319, 1.442695
    %v321 = vpow.pop %v320
    %v322 = vadd.f32 %v321, 1.0
    %v323 = vrcp.pop %v322
    %v324 = vmul.f32 1.0, %v323
    %s325 = sld [smem:[#allocation2 + $0x40]]
    %v326 = vstv %s325
    %v327 = vmul.f32 %v324, %v326
    %s328 = sld [smem:[#allocation2 + $0x41]]
    %v329 = vstv %s328
    %v330 = vadd.f32 %v327, %v329
    %331 = vst [vmem:[#allocation7] sm:$0x1] %v330
    // Predicated region
    $region18: #{tpu_custom_call.1} parent=1 // pred_check
      _
    $region19: #{tpu_custom_call.1} parent=1 // pred_check_branch
      %333 = sbr.rel (0) target = $region21
    $region20: #{tpu_custom_call.1} parent=1 // pred_region
      %s335 = ssub.s32 16, 16
      %336 = vsyncadd [#allocation4], %s335
      %s338 = sshll.u32 [#allocation7], 4
      %s339 = int_to_ptr.vmem [resolvable:$true] %s338
      %341 = dma.vmem_to_hbm [thread:$0]  %s339, 16, %s2, [#allocation4]
    $region21: #{tpu_custom_call.1} parent=1 // pred_fallthru
      _
    // Predicated region
    $region22: #{tpu_custom_call.1} parent=1 // pred_check
      _
    $region23: #{tpu_custom_call.1} parent=1 // pred_check_branch
      %343 = sbr.rel (0) target = $region25
    $region24: #{tpu_custom_call.1} parent=1 // pred_region
      %344 = dma.done [#allocation4], 16
    $region25: #{tpu_custom_call.1} parent=1 // pred_fallthru
      _
    %345 = vsyncpa [#allocation3], 1
    %346 = vsyncpa [#allocation4], 1
    %347 = vsyncpa [#allocation5], 1

</llo_original>
